<compile_context>
chip_gen: v7x
topology: tpu7x:2x2x1
jax: 0.10.0
libtpu: 0.0.40
codegen_flags: <defaults>
</compile_context>

<pallas_src>
import functools
import re

import jax
import jax.numpy as jnp
from jax.experimental import pallas as pl
from jax.experimental.pallas import tpu as pltpu


def _round_up(x, m):
    return (x + m - 1) // m * m


def _tpu_generation_and_vmem():
    """Best-effort TPU generation + per-core VMEM capacity (conservative fallback)."""
    gen = None
    try:
        kind = jax.devices()[0].device_kind
        m = re.search(r"v(\d+)", str(kind).lower())
        if m:
            gen = int(m.group(1))
    except Exception:
        pass
    vmem_cap = (128 << 20) if gen in (5, 6) else (64 << 20)  # unknown/v7x -> 64 MiB
    try:
        info = pltpu.get_tpu_info()
        cap = getattr(info, "vmem_capacity_bytes", None)
        if cap:
            vmem_cap = int(cap)
    except Exception:
        pass
    return gen, vmem_cap


def _pick_tile(n_pad, target):
    for t in (1024, 512, 256, 128):
        if t <= target and n_pad % t == 0:
            return t
    return 128


def _stage1_vmem_bytes(tm, din_p, dout_p):
    # double-buffered h tile + basis matrix + bf16 output tile
    return 2 * tm * din_p * 2 + 2 * din_p * dout_p * 2 + 2 * tm * dout_p * 2


def _agg_vmem_bytes(tm, tk, nb, dout_p, a_bufs, out_bytes):
    a = a_bufs * tm * tk * 2            # adjacency tiles (bf16)
    m = 2 * nb * tk * dout_p * 2        # basis message slab (bf16)
    s = 2 * tm * dout_p * 2             # self-loop message tile (bf16)
    o = 2 * tm * dout_p * out_bytes     # output tile
    acc = tm * dout_p * 4               # f32 accumulator scratch
    return a + m + s + o + acc


# ---------------------------------------------------------------------------
# Stage 1: basis message transform  msgs[b] = h @ basis[b]
#          (B matmuls, not R; W_self is appended as an extra "basis" so the
#           self-loop message is produced here too.)
# ---------------------------------------------------------------------------
def _basis_msg_kernel(h_ref, basis_ref, o_ref):
    o_ref[0] = jnp.dot(h_ref[...], basis_ref[0],
                       preferred_element_type=jnp.float32).astype(o_ref.dtype)


def _basis_messages(h_p, basis_p, tm, vmem_limit):
    n_pad, din_p = h_p.shape
    nb_all, _, dout_p = basis_p.shape
    n_tiles = n_pad // tm
    return pl.pallas_call(
        _basis_msg_kernel,
        out_shape=jax.ShapeDtypeStruct((nb_all, n_pad, dout_p), jnp.bfloat16),
        grid_spec=pltpu.PrefetchScalarGridSpec(
            num_scalar_prefetch=0,
            # node-tile axis first -> megacore shards over nodes, and the h tile
            # is loaded once per dst tile (its block index is constant across b).
            grid=(n_tiles, nb_all),
            in_specs=[
                pl.BlockSpec((tm, din_p), lambda i, b: (i, 0)),
                pl.BlockSpec((1, din_p, dout_p), lambda i, b: (b, 0, 0)),
            ],
            out_specs=pl.BlockSpec((1, tm, dout_p), lambda i, b: (b, i, 0)),
        ),
        compiler_params=pltpu.CompilerParams(
            dimension_semantics=("parallel", "parallel"),
            vmem_limit_bytes=vmem_limit),
        cost_estimate=pl.CostEstimate(
            flops=2 * nb_all * n_pad * din_p * dout_p,
            transcendentals=0,
            bytes_accessed=(n_pad * din_p * 2
                            + n_tiles * nb_all * din_p * dout_p * 2
                            + nb_all * n_pad * dout_p * 2)),
    )(h_p, basis_p)


# ---------------------------------------------------------------------------
# Stage 2: relational aggregation
#   out[i] = act( sum_k sum_r A[r,i,k] @ (sum_b comp[r,b]*msgs[b,k]) [+ self_msg[i]] )
# Grid = (dst tiles, src tiles, relations): relation innermost so the basis
# message slab is DMA'd once per (i, k), not once per (i, k, r).
# ---------------------------------------------------------------------------
def _relgcn_agg_kernel(comp_ref, a_ref, msgs_ref, *rest,
                       num_bases, use_self_loop, apply_relu, combine_dtype):
    if use_self_loop:
        self_ref, o_ref, acc_ref = rest
    else:
        o_ref, acc_ref = rest

    k = pl.program_id(1)
    r = pl.program_id(2)

    @pl.when(jnp.logical_and(k == 0, r == 0))
    def _():
        acc_ref[...] = jnp.zeros_like(acc_ref)

    # Per-relation message from the B basis messages: cheap VPU combine.
    # comp lives flattened in SMEM -> scalar reads; bf16 combine on v6e/v7x.
    base = r * num_bases
    msg = comp_ref[base].astype(combine_dtype) * msgs_ref[0].astype(combine_dtype)
    for b in range(1, num_bases):
        msg = msg + (comp_ref[base + b].astype(combine_dtype)
                     * msgs_ref[b].astype(combine_dtype))
    msg = msg.astype(jnp.bfloat16)

    # Aggregate on the MXU into the resident f32 scratch accumulator.
    acc_ref[...] += jnp.dot(a_ref[0], msg, preferred_element_type=jnp.float32)

    is_last = jnp.logical_and(k == pl.num_programs(1) - 1,
                              r == pl.num_programs(2) - 1)

    @pl.when(is_last)
    def _():
        out = acc_ref[...]
        if use_self_loop:
            out = out + self_ref[0].astype(jnp.float32)
        if apply_relu:
            out = jnp.maximum(out, 0.0)
        o_ref[...] = out.astype(o_ref.dtype)


def _aggregate(comp_flat, adj, msgs, self_msg, *, tm, tk, a_bufs,
               use_self_loop, apply_relu, out_dtype, combine_dtype, vmem_limit):
    num_rels, n_pad, _ = adj.shape
    nb, _, dout_p = msgs.shape
    out_bytes = jnp.dtype(out_dtype).itemsize
    n_dst_tiles = n_pad // tm

    grid = (n_dst_tiles, n_pad // tk, num_rels)

    a_kwargs = {}
    if a_bufs >= 3:
        a_kwargs["pipeline_mode"] = pl.Buffered(a_bufs)

    in_specs = [
        pl.BlockSpec(memory_space=pltpu.MemorySpace.SMEM),                # comp (R*B,)
        pl.BlockSpec((1, tm, tk), lambda i, k, r: (r, i, k), **a_kwargs),  # A_r tile
        pl.BlockSpec((nb, tk, dout_p), lambda i, k, r: (0, k, 0)),         # basis msgs
    ]
    inputs = [comp_flat, adj, msgs]
    if use_self_loop:
        in_specs.append(pl.BlockSpec((1, tm, dout_p), lambda i, k, r: (0, i, 0)))
        inputs.append(self_msg)

    flops = (2 * num_rels * n_pad * n_pad * dout_p
             + 2 * nb * num_rels * n_dst_tiles * n_pad * dout_p)
    bytes_accessed = (num_rels * n_pad * n_pad * 2
                      + n_dst_tiles * nb * n_pad * dout_p * 2
                      + n_pad * dout_p * 2
                      + n_pad * dout_p * out_bytes)

    kernel = functools.partial(_relgcn_agg_kernel, num_bases=nb,
                               use_self_loop=use_self_loop,
                               apply_relu=apply_relu,
                               combine_dtype=combine_dtype)

    return pl.pallas_call(
        kernel,
        out_shape=jax.ShapeDtypeStruct((n_pad, dout_p), out_dtype),
        grid_spec=pltpu.PrefetchScalarGridSpec(
            num_scalar_prefetch=0,
            grid=grid,
            in_specs=in_specs,
            out_specs=pl.BlockSpec((tm, dout_p), lambda i, k, r: (i, 0)),
            scratch_shapes=[pltpu.VMEM((tm, dout_p), jnp.float32)],
        ),
        compiler_params=pltpu.CompilerParams(
            dimension_semantics=("parallel", "arbitrary", "arbitrary"),
            vmem_limit_bytes=vmem_limit),
        cost_estimate=pl.CostEstimate(flops=flops, transcendentals=0,
                                      bytes_accessed=bytes_accessed),
    )(*inputs)


def relgcn_basis_layer(adj_pad, h_p, basis, comp, w_self, *,
                       use_self_loop, apply_relu, out_dtype, tpu_gen, vmem_cap):
    """adj_pad: (R, n_pad, n_pad) bf16 normalized dense adjacency (dst, src);
    h_p: (n_pad, din_p) bf16 padded features; basis: (B, din, dout); comp: (R, B);
    w_self: (din, dout) | None.  Returns padded (n_pad, dout_p) activations."""
    num_rels, n_pad, _ = adj_pad.shape
    _, din_p = h_p.shape
    num_bases, din, dout = basis.shape

    # v6e/v7x MXUs are 256 wide -> pad wide outputs to 256; v5e stays at 128.
    if (tpu_gen is None or tpu_gen >= 6) and dout > 128:
        dout_p = _round_up(dout, 256)
    else:
        dout_p = _round_up(dout, 128)

    # Generation-dependent tile / VMEM budget.
    big_vmem = vmem_cap >= (100 << 20)
    target = 1024 if big_vmem else 512
    vmem_limit = (100 << 20) if big_vmem else (48 << 20)
    budget = int(vmem_limit * 0.75)
    out_bytes = jnp.dtype(out_dtype).itemsize

    tm = _pick_tile(n_pad, target)
    if n_pad // tm == 1 and tm > 128:
        tm //= 2                      # megacore: prefer >=2 dst tiles
    tk = _pick_tile(n_pad, target)
    a_bufs = 3
    while _agg_vmem_bytes(tm, tk, num_bases, dout_p, a_bufs, out_bytes) > budget:
        if a_bufs > 2:
            a_bufs = 2
        elif tk > 128:
            tk //= 2
        elif tm > 128:
            tm //= 2
        else:
            break
    tm1 = tm
    while _stage1_vmem_bytes(tm1, din_p, dout_p) > budget and tm1 > 128:
        tm1 //= 2

    # Pad basis (and W_self as an extra basis) to lane-aligned bf16.
    nb_all = num_bases + (1 if use_self_loop else 0)
    basis_p = jnp.zeros((nb_all, din_p, dout_p), jnp.bfloat16)
    basis_p = basis_p.at[:num_bases, :din, :dout].set(basis.astype(jnp.bfloat16))
    if use_self_loop:
        basis_p = basis_p.at[num_bases, :din, :dout].set(w_self.astype(jnp.bfloat16))

    comp_flat = comp.astype(jnp.float32).reshape(-1)   # 1D for compact SMEM padding
    combine_dtype = jnp.float32 if (tpu_gen is not None and tpu_gen < 6) else jnp.bfloat16

    msgs_all = _basis_messages(h_p, basis_p, tm1, vmem_limit)   # (nb_all, n_pad, dout_p)
    if use_self_loop:
        msgs = msgs_all[:num_bases]
        self_msg = msgs_all[num_bases:num_bases + 1]
    else:
        msgs, self_msg = msgs_all, None

    return _aggregate(comp_flat, adj_pad, msgs, self_msg,
                      tm=tm, tk=tk, a_bufs=a_bufs,
                      use_self_loop=use_self_loop, apply_relu=apply_relu,
                      out_dtype=out_dtype, combine_dtype=combine_dtype,
                      vmem_limit=vmem_limit)


class BaseRelGCNPallas:
    """JAX/Pallas equivalent of BaseRelGCN with basis-regularized RelGraphConv
    hidden layers (the concrete layer DGL's link.py subclass supplies)."""

    def __init__(self, num_nodes, h_dim, out_dim, num_rels, num_bases,
                 regularizer='basis', norm='n', num_hidden_layers=1,
                 dropout=0, use_self_loop=False, key=None):
        assert regularizer == 'basis'
        # TODO(synk): dropout > 0 not implemented (reference default is 0).
        assert dropout == 0
        self.num_nodes = num_nodes
        self.h_dim = h_dim
        self.out_dim = out_dim
        self.num_rels = num_rels
        self.num_bases = num_rels if num_bases < 0 else num_bases
        self.num_hidden_layers = num_hidden_layers
        self.dropout = dropout
        self.use_self_loop = use_self_loop
        self.n_pad = _round_up(max(int(num_nodes), 1), 128)
        self.tpu_gen, self.vmem_cap = _tpu_generation_and_vmem()

        key = jax.random.PRNGKey(0) if key is None else key
        self.layers = []
        for idx in range(num_hidden_layers):
            key, k1, k2, k3 = jax.random.split(key, 4)
            din = h_dim
            dout = h_dim if idx < num_hidden_layers - 1 else out_dim
            basis = jax.random.normal(k1, (self.num_bases, din, dout),
                                      jnp.float32) * (1.0 / jnp.sqrt(din))
            comp = jax.random.normal(k2, (num_rels, self.num_bases),
                                     jnp.float32) * (1.0 / jnp.sqrt(self.num_bases))
            w_self = jax.random.normal(k3, (din, dout),
                                       jnp.float32) * (1.0 / jnp.sqrt(din))
            self.layers.append(dict(basis=basis, comp=comp, w_self=w_self))

    def _dense_adj(self, src, dst, etype, norm):
        # Fold the per-edge norm ('n') into a dense per-relation adjacency
        # (R, N_dst, N_src); left-multiplication == norm applied on the message.
        # TODO(synk): replace dense adjacency with padded per-relation block-sparse
        #             CSR + scalar-prefetch block lists (dense is O(R*N^2) in HBM).
        adj = jnp.zeros((self.num_rels, self.n_pad, self.n_pad), jnp.float32)
        adj = adj.at[etype, dst, src].add(norm)
        return adj.astype(jnp.bfloat16)

    def forward(self, g, h, r, norm):
        """g = (src, dst) edge index arrays, r = per-edge relation ids,
        norm = per-edge norm scalars, h = (N, h_dim) node features."""
        src, dst = g
        adj = self._dense_adj(src, dst, r, norm)

        n = self.num_nodes
        din_p0 = _round_up(self.h_dim, 128)
        h_p = jnp.zeros((self.n_pad, din_p0), jnp.bfloat16)
        h_p = h_p.at[:n, :self.h_dim].set(jnp.asarray(h, jnp.float32).astype(jnp.bfloat16))

        n_layers = len(self.layers)
        for idx, layer in enumerate(self.layers):
            is_last = idx == n_layers - 1
            h_p = relgcn_basis_layer(
                adj, h_p, layer['basis'], layer['comp'],
                layer['w_self'] if self.use_self_loop else None,
                use_self_loop=self.use_self_loop,
                apply_relu=not is_last,                         # last layer linear
                out_dtype=jnp.float32 if is_last else jnp.bfloat16,
                tpu_gen=self.tpu_gen, vmem_cap=self.vmem_cap)
        return h_p[:n, :self.out_dim]


if __name__ == "__main__":
    key = jax.random.PRNGKey(0)
    num_nodes, h_dim, out_dim = 16, 32, 32
    num_rels, num_bases, num_edges = 4, 2, 64

    k_h, k_src, k_dst, k_rel, k_params = jax.random.split(key, 5)
    h = jax.random.normal(k_h, (num_nodes, h_dim), jnp.float32)
    src = jax.random.randint(k_src, (num_edges,), 0, num_nodes)
    dst = jax.random.randint(k_dst, (num_edges,), 0, num_nodes)
    etype = jax.random.randint(k_rel, (num_edges,), 0, num_rels)
    # per-edge norm: 1 / in-degree of dst
    deg = jnp.zeros((num_nodes,), jnp.float32).at[dst].add(1.0)
    norm = 1.0 / jnp.maximum(deg[dst], 1.0)

    model = BaseRelGCNPallas(num_nodes, h_dim, out_dim, num_rels, num_bases,
                             regularizer='basis', norm='n',
                             num_hidden_layers=2, dropout=0,
                             use_self_loop=True, key=k_params)

    out = model.forward((src, dst), h, etype, norm)
    out = jax.block_until_ready(out)
    assert out.shape == (num_nodes, out_dim)
    assert bool(jnp.all(jnp.isfinite(out)))
    print("KERNEL_OK")
</pallas_src>

<mosaic_0001>
module attributes {stable_mosaic.version = 11 : i64} {
  func.func @_basis_msg_kernel(%arg0: i32, %arg1: i32, %arg2: memref<128x128xbf16, #tpu.memory_space<vmem>>, %arg3: memref<1x128x128xbf16, #tpu.memory_space<vmem>>, %arg4: memref<1x128x128xbf16, #tpu.memory_space<vmem>>) attributes {dimension_semantics = [#tpu.dimension_semantics<parallel>, #tpu.dimension_semantics<parallel>], iteration_bounds = array<i64: 1, 3>, scalar_prefetch = 0 : i64, scratch_operands = 0 : i64, tpu.core_type = #tpu.core_type<tc>, window_params = [{transform_indices = @transform_0, window_bounds = array<i64: 128, 128>}, {transform_indices = @transform_1, window_bounds = array<i64: 1, 128, 128>}, {transform_indices = @transform_2, window_bounds = array<i64: 1, 128, 128>}]} {
    %c0 = arith.constant 0 : index
    %c0_0 = arith.constant 0 : index
    %0 = vector.load %arg2[%c0, %c0_0] : memref<128x128xbf16, #tpu.memory_space<vmem>>, vector<128x128xbf16>
    %c0_1 = arith.constant 0 : index
    %c0_2 = arith.constant 0 : index
    %c0_3 = arith.constant 0 : index
    %1 = vector.load %arg3[%c0_1, %c0_2, %c0_3] : memref<1x128x128xbf16, #tpu.memory_space<vmem>>, vector<1x128x128xbf16>
    %2 = vector.shape_cast %1 : vector<1x128x128xbf16> to vector<128x128xbf16>
    %cst = arith.constant dense<0.000000e+00> : vector<128x128xf32>
    %3 = tpu.matmul %0, %2, %cst {dimension_numbers = #tpu.dot_dimension_numbers<[1], [0], [0], [1], [0, 0, 1, 1], [], []>} : vector<128x128xbf16>, vector<128x128xbf16>, vector<128x128xf32> -> vector<128x128xf32>
    %4 = arith.truncf %3 : vector<128x128xf32> to vector<128x128xbf16>
    %c0_4 = arith.constant 0 : index
    %c0_5 = arith.constant 0 : index
    %c0_6 = arith.constant 0 : index
    %5 = vector.load %arg4[%c0_4, %c0_5, %c0_6] : memref<1x128x128xbf16, #tpu.memory_space<vmem>>, vector<1x128x128xbf16>
    %6 = vector.shape_cast %5 : vector<1x128x128xbf16> to vector<128x128xbf16>
    %7 = vector.shape_cast %4 : vector<128x128xbf16> to vector<1x128x128xbf16>
    tpu.vector_store %arg4[%c0_4, %c0_5, %c0_6], %7 {strides = array<i32>} : memref<1x128x128xbf16, #tpu.memory_space<vmem>>, vector<1x128x128xbf16>,
    return
  }
  func.func @transform_0(%arg0: i32, %arg1: i32) -> (i32, i32) {
    %c0_i32 = arith.constant 0 : i32
    %c0_i32_0 = arith.constant 0 : i32
    return %arg0, %c0_i32 : i32, i32
  }
  func.func @transform_1(%arg0: i32, %arg1: i32) -> (i32, i32, i32) {
    %c0_i32 = arith.constant 0 : i32
    %c0_i32_0 = arith.constant 0 : i32
    %c0_i32_1 = arith.constant 0 : i32
    return %arg1, %c0_i32, %c0_i32_0 : i32, i32, i32
  }
  func.func @transform_2(%arg0: i32, %arg1: i32) -> (i32, i32, i32) {
    %c0_i32 = arith.constant 0 : i32
    %c0_i32_0 = arith.constant 0 : i32
    return %arg1, %arg0, %c0_i32 : i32, i32, i32
  }
}

</mosaic_0001>

<llo_original>
// kernel: tpu_custom_call.1
$region0: #{tpu_custom_call.1}
  #allocation0 [shape = 'u32[]', space=smem, size = 0x4, offset = 0x4, fixed_abs, tag = 'smem constant byte address 0x4 - core index']
  #allocation1 [shape = 'u32[144,128]{1,0:T(1,128)}', space=vmem, size = 0x12000, scoped, tag = 'internal scratch']
  %s0 = inlined_call_operand.hbm [shape: bf16[128,128], index: 0, kind: input, shape index: {}]
  %s1 = inlined_call_operand.hbm [shape: bf16[3,128,128], index: 1, kind: input, shape index: {}]
  %s2 = inlined_call_operand.hbm [shape: bf16[3,128,128], index: 2, kind: output, shape index: {}]
  %s3 = sld [smem:[#allocation0]]
  $region49: #{tpu_custom_call.1} parent=0
    _
  %s5 = ssub.s32 1, %s3
  %s6 = scalar_select 0, %s5, %s3
  $region1: #{tpu_custom_call.1} parent=0
    #allocation2 [shape = 'u8[32768]{0}', space=vmem, size = 0x8000, scoped, tag = 'input window, operand 0, single buffered']
    #allocation3 [shape = 's32[2]{0}', space=sflag, size = 0x8, scoped, tag = 'scoped memory for tpu_custom_call.1']
    #allocation4 [shape = 's32[2]{0}', space=sflag, size = 0x8, scoped, tag = 'scoped memory for tpu_custom_call.1']
    #allocation5 [shape = 'u8[65536]{0}', space=vmem, size = 0x10000, scoped, tag = 'input window, operand 1']
    #allocation6 [shape = 's32[2]{0}', space=sflag, size = 0x8, scoped, tag = 'scoped memory for tpu_custom_call.1']
    #allocation7 [shape = 'u8[65536]{0}', space=vmem, size = 0x10000, scoped, tag = 'output window, operand 0']
    %7 = vsyncpa [#allocation3], 0
    %8 = vsyncpa [#allocation6], 0
    %s9 = scalar_lea.sflag [#allocation6], 1
    %10 = vsyncpa %s9, 0
    %11 = vsyncpa [#allocation4], 0
    %s12 = scalar_lea.sflag [#allocation4], 1
    %13 = vsyncpa %s12, 0
    loop: start=0, step=1, limit=5
    $region2: #{tpu_custom_call.1} parent=1 // loop_pre_header
      _
    $region3: #{tpu_custom_call.1} parent=1 // loop_header
      %s15 = sphi 0, %s19
      %p16 = scmp.ge.s32.totalorder %s15, 5
      %s22 = sphi 0, %s34
      %s23 = sphi 0, %s30
      %s24 = sphi 0, %s22
      %s25 = sphi 0, %s23
      %s26 = sphi 0, %s24
      %s27 = sphi 0, %s25
      %s37 = sphi 0, %s39
      %s40 = sphi 0, %s37
      %s41 = sphi 0, %s40
      %s57 = sphi 0, %s41
      %s63 = sphi 0, %s65
      %s66 = sphi 0, %s63
      %s67 = sphi 0, %s66
      %s83 = sphi 0, %s67
      %s91 = sphi 0, %s93
      %s94 = sphi 0, %s91
      %s95 = sphi 0, %s94
      %s111 = sphi 0, %s95
    $region4: #{tpu_custom_call.1} parent=1 // loop_header_branch
      %18 = sbr.rel (%p16) target = $region8
    $region5: #{tpu_custom_call.1} parent=1 // loop_body
      %s20 = ssub.s32 %s15, 1
      %s21 = ssub.s32 %s15, 2
      %s28 = sadd.s32 1, %s23
      %p29 = scmp.ge.s32.totalorder %s28, 3
      %s30 = scalar_select %p29, 0, %s28
      %s31 = sadd.s32 1, %s22
      %s32 = scalar_select %p29, %s31, %s22
      %p33 = scmp.ge.s32.totalorder %s32, 1
      %s34 = scalar_select %p33, 0, %s32
      %s35 = ssub.s32 %s22, %s34
      %p36 = scmp.eq.s32.totalorder %s35, 0
      %s38 = sadd.s32 %s37, 1
      %s39 = scalar_select %p36, %s37, %s38
      %p42 = pneg %p36
      %p43 = scmp.eq.s32.totalorder %s15, 2
      %p44 = por %p42, %p43
      %p45 = scmp.ne.s32.totalorder %s37, %s40
      %p46 = scmp.eq.s32.totalorder %s15, 0
      %p47 = por %p45, %p46
      %p48 = scmp.ne.s32.totalorder %s37, %s40
      %p49 = scmp.eq.s32.totalorder %s20, 2
      %p50 = por %p48, %p49
      %p51 = scmp.ne.s32.totalorder %s40, %s41
      %p52 = scmp.eq.s32.totalorder %s20, 0
      %p53 = por %p51, %p52
      %p54 = scmp.ne.s32.totalorder %s40, %s41
      %p55 = scmp.eq.s32.totalorder %s21, 2
      %p56 = por %p54, %p55
      %p58 = scmp.ne.s32.totalorder %s41, %s57
      %p59 = scmp.eq.s32.totalorder %s21, 0
      %p60 = por %p58, %p59
      %s61 = ssub.s32 %s23, %s30
      %p62 = scmp.eq.s32.totalorder %s61, 0
      %s64 = sadd.s32 %s63, 1
      %s65 = scalar_select %p62, %s63, %s64
      %p68 = pneg %p62
      %p69 = scmp.eq.s32.totalorder %s15, 2
      %p70 = por %p68, %p69
      %p71 = scmp.ne.s32.totalorder %s63, %s66
      %p72 = scmp.eq.s32.totalorder %s15, 0
      %p73 = por %p71, %p72
      %p74 = scmp.ne.s32.totalorder %s63, %s66
      %p75 = scmp.eq.s32.totalorder %s20, 2
      %p76 = por %p74, %p75
      %p77 = scmp.ne.s32.totalorder %s66, %s67
      %p78 = scmp.eq.s32.totalorder %s20, 0
      %p79 = por %p77, %p78
      %p80 = scmp.ne.s32.totalorder %s66, %s67
      %p81 = scmp.eq.s32.totalorder %s21, 2
      %p82 = por %p80, %p81
      %p84 = scmp.ne.s32.totalorder %s67, %s83
      %p85 = scmp.eq.s32.totalorder %s21, 0
      %p86 = por %p84, %p85
      %s87 = ssub.s32 %s23, %s30
      %s88 = ssub.s32 %s22, %s34
      %s89 = sor.u32 %s87, %s88
      %p90 = scmp.eq.s32.totalorder %s89, 0
      %s92 = sadd.s32 %s91, 1
      %s93 = scalar_select %p90, %s91, %s92
      %p96 = pneg %p90
      %p97 = scmp.eq.s32.totalorder %s15, 2
      %p98 = por %p96, %p97
      %p99 = scmp.ne.s32.totalorder %s91, %s94
      %p100 = scmp.eq.s32.totalorder %s15, 0
      %p101 = por %p99, %p100
      %p102 = scmp.ne.s32.totalorder %s91, %s94
      %p103 = scmp.eq.s32.totalorder %s20, 2
      %p104 = por %p102, %p103
      %p105 = scmp.ne.s32.totalorder %s94, %s95
      %p106 = scmp.eq.s32.totalorder %s20, 0
      %p107 = por %p105, %p106
      %p108 = scmp.ne.s32.totalorder %s94, %s95
      %p109 = scmp.eq.s32.totalorder %s21, 2
      %p110 = por %p108, %p109
      %p112 = scmp.ne.s32.totalorder %s95, %s111
      %p113 = scmp.eq.s32.totalorder %s21, 0
      %p114 = por %p112, %p113
      %p115 = scmp.le.s32.totalorder 1, %s15
      %p116 = scmp.lt.s32.totalorder %s15, 4
      %p117 = pnand %p115, %p116
      %p118 = pneg %p117
      // Predicated region
      $region9: #{tpu_custom_call.1} parent=5 // pred_check
        _
      $region10: #{tpu_custom_call.1} parent=5 // pred_check_branch
        %120 = sbr.rel (%p117) target = $region12
      $region11: #{tpu_custom_call.1} parent=5 // pred_region
        %s121 = ssub.s32 %s15, 1
        // Predicated region
        $region13: #{tpu_custom_call.1} parent=11 // pred_check
          %p122 = pneg %p53
        $region14: #{tpu_custom_call.1} parent=11 // pred_check_branch
          %124 = sbr.rel (%p122) target = $region16
        $region15: #{tpu_custom_call.1} parent=11 // pred_region
          %s125 = smul.u32 16, %s24
          %s127 = ssub.s32 1024, 1024
          %128 = vsyncadd [#allocation3], %s127
          %s129 = smul.addr %s125, 64
          %s130 = scalar_lea.hbm %s0, %s129
          %s131 = sshll.u32 [#allocation2], 4
          %s132 = int_to_ptr.vmem [resolvable:$true] %s131
          %137 = dma.hbm_to_vmem [thread:$0]  %s130, 1024, %s132, [#allocation3], 64, 64, 4
        $region16: #{tpu_custom_call.1} parent=11 // pred_fallthru
          _
      $region12: #{tpu_custom_call.1} parent=5 // pred_fallthru
        _
      %p138 = scmp.lt.s32.totalorder %s15, 3
      // Predicated region
      $region17: #{tpu_custom_call.1} parent=5 // pred_check
        %p139 = pneg %p138
      $region18: #{tpu_custom_call.1} parent=5 // pred_check_branch
        %141 = sbr.rel (%p139) target = $region20
      $region19: #{tpu_custom_call.1} parent=5 // pred_region
        // Predicated region
        $region21: #{tpu_custom_call.1} parent=19 // pred_check
          %p142 = pneg %p73
        $region22: #{tpu_custom_call.1} parent=19 // pred_check_branch
          %144 = sbr.rel (%p142) target = $region24
        $region23: #{tpu_custom_call.1} parent=19 // pred_region
          %s145 = sand.u32 %s63, 1
          %s146 = scalar_lea.sflag [#allocation6], %s145
          %s147 = sand.u32 %s63, 1
          %s148 = smul.addr %s147, 64
          %s149 = scalar_lea.vmem [#allocation5], %s148
          %s151 = ssub.s32 1024, 1024
          %152 = vsyncadd %s146, %s151
          %s153 = smul.addr %s23, 16
          %s154 = smul.addr %s153, 64
          %s155 = scalar_lea.hbm %s1, %s154
          %s156 = sshll.u32 %s149, 4
          %s157 = int_to_ptr.vmem [resolvable:$true] %s156
          %162 = dma.hbm_to_vmem [thread:$0]  %s155, 1024, %s157, %s146, 64, 64, 4
        $region24: #{tpu_custom_call.1} parent=19 // pred_fallthru
          _
      $region20: #{tpu_custom_call.1} parent=5 // pred_fallthru
        _
      %p163 = scmp.le.s32.totalorder 1, %s15
      %p164 = scmp.lt.s32.totalorder %s15, 4
      %p165 = pnand %p163, %p164
      %p166 = pneg %p165
      // Predicated region
      $region25: #{tpu_custom_call.1} parent=5 // pred_check
        _
      $region26: #{tpu_custom_call.1} parent=5 // pred_check_branch
        %168 = sbr.rel (%p165) target = $region28
      $region27: #{tpu_custom_call.1} parent=5 // pred_region
        %s169 = ssub.s32 %s15, 1
        // Predicated region
        $region29: #{tpu_custom_call.1} parent=27 // pred_check
          %p170 = pneg %p53
        $region30: #{tpu_custom_call.1} parent=27 // pred_check_branch
          %172 = sbr.rel (%p170) target = $region32
        $region31: #{tpu_custom_call.1} parent=27 // pred_region
          %173 = dma.done [#allocation3], 1024
        $region32: #{tpu_custom_call.1} parent=27 // pred_fallthru
          _
        %s174 = sand.u32 %s66, 1
        %s175 = scalar_lea.sflag [#allocation6], %s174
        %s176 = sand.u32 %s66, 1
        %s177 = smul.addr %s176, 64
        %s178 = scalar_lea.vmem [#allocation5], %s177
        // Predicated region
        $region33: #{tpu_custom_call.1} parent=27 // pred_check
          %p179 = pneg %p79
        $region34: #{tpu_custom_call.1} parent=27 // pred_check_branch
          %181 = sbr.rel (%p179) target = $region36
        $region35: #{tpu_custom_call.1} parent=27 // pred_region
          %182 = dma.done %s175, 1024
        $region36: #{tpu_custom_call.1} parent=27 // pred_fallthru
          _
        %p183 = pneg %p53
        %p184 = pneg %p50
        %s185 = sand.u32 %s66, 1
        %s186 = scalar_lea.sflag [#allocation6], %s185
        %s187 = sand.u32 %s66, 1
        %s188 = smul.addr %s187, 64
        %s189 = scalar_lea.vmem [#allocation5], %s188
        %p190 = pneg %p79
        %p191 = pneg %p76
        %p192 = pneg %p107
        %p193 = pneg %p104
        %s194 = sand.u32 %s94, 1
        %s195 = scalar_lea.sflag [#allocation4], %s194
        %s196 = sand.u32 %s94, 1
        %s197 = smul.addr %s196, 64
        %s198 = scalar_lea.vmem [#allocation7], %s197
        %s199 = smul.u32 16, %s24
        %s200 = smul.u32 16, %s24
        %v202 = vld [vmem:[#allocation2] sm:$0xf]
        %v203 = vld [vmem:[#allocation2 + $0x4] sm:$0xf]
        %v204 = vld [vmem:[#allocation2 + $0x8] sm:$0xf]
        %v205 = vld [vmem:[#allocation2 + $0xc] sm:$0xf]
        %v206 = vld [vmem:[#allocation2 + $0x10] sm:$0xf]
        %v207 = vld [vmem:[#allocation2 + $0x14] sm:$0xf]
        %v208 = vld [vmem:[#allocation2 + $0x18] sm:$0xf]
        %v209 = vld [vmem:[#allocation2 + $0x1c] sm:$0xf]
        %v210 = vld [vmem:[#allocation2 + $0x20] sm:$0xf]
        %v211 = vld [vmem:[#allocation2 + $0x24] sm:$0xf]
        %v212 = vld [vmem:[#allocation2 + $0x28] sm:$0xf]
        %v213 = vld [vmem:[#allocation2 + $0x2c] sm:$0xf]
        %v214 = vld [vmem:[#allocation2 + $0x30] sm:$0xf]
        %v215 = vld [vmem:[#allocation2 + $0x34] sm:$0xf]
        %v216 = vld [vmem:[#allocation2 + $0x38] sm:$0xf]
        %v217 = vld [vmem:[#allocation2 + $0x3c] sm:$0xf]
        %v218 = vld [vmem:[%s178] sm:$0xf]
        %v219 = vld [vmem:[%s178 + $0x4] sm:$0xf]
        %v220 = vld [vmem:[%s178 + $0x8] sm:$0xf]
        %v221 = vld [vmem:[%s178 + $0xc] sm:$0xf]
        %v222 = vld [vmem:[%s178 + $0x10] sm:$0xf]
        %v223 = vld [vmem:[%s178 + $0x14] sm:$0xf]
        %v224 = vld [vmem:[%s178 + $0x18] sm:$0xf]
        %v225 = vld [vmem:[%s178 + $0x1c] sm:$0xf]
        %v226 = vld [vmem:[%s178 + $0x20] sm:$0xf]
        %v227 = vld [vmem:[%s178 + $0x24] sm:$0xf]
        %v228 = vld [vmem:[%s178 + $0x28] sm:$0xf]
        %v229 = vld [vmem:[%s178 + $0x2c] sm:$0xf]
        %v230 = vld [vmem:[%s178 + $0x30] sm:$0xf]
        %v231 = vld [vmem:[%s178 + $0x34] sm:$0xf]
        %v232 = vld [vmem:[%s178 + $0x38] sm:$0xf]
        %v233 = vld [vmem:[%s178 + $0x3c] sm:$0xf]
        %v250 = vunpack.c.l.b16 %v202
        %v251 = vunpack.c.l.b16 %v203
        %v252 = vunpack.c.l.b16 %v204
        %v253 = vunpack.c.l.b16 %v205
        %v254 = vunpack.c.l.b16 %v206
        %v255 = vunpack.c.l.b16 %v207
        %v256 = vunpack.c.l.b16 %v208
        %v257 = vunpack.c.l.b16 %v209
        %v258 = vunpack.c.l.b16 %v210
        %v259 = vunpack.c.l.b16 %v211
        %v260 = vunpack.c.l.b16 %v212
        %v261 = vunpack.c.l.b16 %v213
        %v262 = vunpack.c.l.b16 %v214
        %v263 = vunpack.c.l.b16 %v215
        %v264 = vunpack.c.l.b16 %v216
        %v265 = vunpack.c.l.b16 %v217
        %v266 = vpack.c.b16 %v251, %v250
        %v267 = vpack.c.b16 %v253, %v252
        %v268 = vpack.c.b16 %v255, %v254
        %v269 = vpack.c.b16 %v257, %v256
        %v270 = vpack.c.b16 %v259, %v258
        %v271 = vpack.c.b16 %v261, %v260
        %v272 = vpack.c.b16 %v263, %v262
        %v273 = vpack.c.b16 %v265, %v264
        %v298 = vunpack.c.l.b16 %v218
        %v299 = vunpack.c.l.b16 %v219
        %v300 = vunpack.c.l.b16 %v220
        %v301 = vunpack.c.l.b16 %v221
        %v302 = vunpack.c.l.b16 %v222
        %v303 = vunpack.c.l.b16 %v223
        %v304 = vunpack.c.l.b16 %v224
        %v305 = vunpack.c.l.b16 %v225
        %v306 = vunpack.c.l.b16 %v226
        %v307 = vunpack.c.l.b16 %v227
        %v308 = vunpack.c.l.b16 %v228
        %v309 = vunpack.c.l.b16 %v229
        %v310 = vunpack.c.l.b16 %v230
        %v311 = vunpack.c.l.b16 %v231
        %v312 = vunpack.c.l.b16 %v232
        %v313 = vunpack.c.l.b16 %v233
        %v314 = vpack.c.b16 %v299, %v298
        %v315 = vpack.c.b16 %v301, %v300
        %v316 = vpack.c.b16 %v303, %v302
        %v317 = vpack.c.b16 %v305, %v304
        %v318 = vpack.c.b16 %v307, %v306
        %v319 = vpack.c.b16 %v309, %v308
        %v320 = vpack.c.b16 %v311, %v310
        %v321 = vpack.c.b16 %v313, %v312
        %330 = vmatprep.subr.bf16.mxu0 0
        %331 = vmatpush1.bf16.msra.mxu0 %v314
        %332 = vmatprep.subr.bf16.mxu0 0
        %333 = vmatpush1.bf16.msra.mxu0 %v315
        %334 = vmatprep.subr.bf16.mxu0 0
        %335 = vmatpush1.bf16.msra.mxu0 %v316
        %336 = vmatprep.subr.bf16.mxu0 0
        %337 = vmatpush1.bf16.msra.mxu0 %v317
        %338 = vmatprep.subr.bf16.mxu0 0
        %339 = vmatpush1.bf16.msra.mxu0 %v318
        %340 = vmatprep.subr.bf16.mxu0 0
        %341 = vmatpush1.bf16.msra.mxu0 %v319
        %342 = vmatprep.subr.bf16.mxu0 0
        %343 = vmatpush1.bf16.msra.mxu0 %v320
        %344 = vmatprep.subr.bf16.mxu0 0
        %345 = vmatpush1.bf16.msra.mxu0 %v321
        %346 = vmatprep.subr.bf16.mxu0 0
        %347 = vmatpush1.bf16.msra.mxu0 0
        %348 = vmatprep.subr.bf16.mxu0 0
        %349 = vmatpush1.bf16.msra.mxu0 0
        %350 = vmatprep.subr.bf16.mxu0 0
        %351 = vmatpush1.bf16.msra.mxu0 0
        %352 = vmatprep.subr.bf16.mxu0 0
        %353 = vmatpush1.bf16.msra.mxu0 0
        %354 = vmatprep.subr.bf16.mxu0 0
        %355 = vmatpush1.bf16.msra.mxu0 0
        %356 = vmatprep.subr.bf16.mxu0 0
        %357 = vmatpush1.bf16.msra.mxu0 0
        %358 = vmatprep.subr.bf16.mxu0 0
        %359 = vmatpush1.bf16.msra.mxu0 0
        %360 = vmatprep.subr.bf16.mxu0 0
        %361 = vmatpush1.bf16.msra.mxu0 0
        %362 = vmatprep.mubr.bf16.mxu0 0
        %363 = vmatmul.mubr.bf16.gmra.mrb[0].mxu0 %v266
        %v364 = vpop.f32.mrb[0].mxu0
        %v365 = vadd.f32 0.0, %v364
        %v366 = vpop.f32.mrb[0].mxu0
        %v367 = vpop.f32.mrb[0].mxu0
        %v368 = vadd.f32 0.0, %v367
        %v369 = vpop.f32.mrb[0].mxu0
        %370 = vmatprep.mubr.bf16.mxu0 0
        %371 = vmatmul.mubr.bf16.gmra.mrb[0].mxu0 %v267
        %v372 = vpop.f32.mrb[0].mxu0
        %v373 = vadd.f32 0.0, %v372
        %v374 = vpop.f32.mrb[0].mxu0
        %v375 = vpop.f32.mrb[0].mxu0
        %v376 = vadd.f32 0.0, %v375
        %v377 = vpop.f32.mrb[0].mxu0
        %378 = vmatprep.mubr.bf16.mxu0 0
        %379 = vmatmul.mubr.bf16.gmra.mrb[0].mxu0 %v268
        %v380 = vpop.f32.mrb[0].mxu0
        %v381 = vadd.f32 0.0, %v380
        %v382 = vpop.f32.mrb[0].mxu0
        %v383 = vpop.f32.mrb[0].mxu0
        %v384 = vadd.f32 0.0, %v383
        %v385 = vpop.f32.mrb[0].mxu0
        %386 = vmatprep.mubr.bf16.mxu0 0
        %387 = vmatmul.mubr.bf16.gmra.mrb[0].mxu0 %v269
        %v388 = vpop.f32.mrb[0].mxu0
        %v389 = vadd.f32 0.0, %v388
        %v390 = vpop.f32.mrb[0].mxu0
        %v391 = vpop.f32.mrb[0].mxu0
        %v392 = vadd.f32 0.0, %v391
        %v393 = vpop.f32.mrb[0].mxu0
        %394 = vmatprep.mubr.bf16.mxu0 0
        %395 = vmatmul.mubr.bf16.gmra.mrb[0].mxu0 %v270
        %v396 = vpop.f32.mrb[0].mxu0
        %v397 = vadd.f32 0.0, %v396
        %v398 = vpop.f32.mrb[0].mxu0
        %v399 = vpop.f32.mrb[0].mxu0
        %v400 = vadd.f32 0.0, %v399
        %v401 = vpop.f32.mrb[0].mxu0
        %402 = vmatprep.mubr.bf16.mxu0 0
        %403 = vmatmul.mubr.bf16.gmra.mrb[0].mxu0 %v271
        %v404 = vpop.f32.mrb[0].mxu0
        %v405 = vadd.f32 0.0, %v404
        %v406 = vpop.f32.mrb[0].mxu0
        %v407 = vpop.f32.mrb[0].mxu0
        %v408 = vadd.f32 0.0, %v407
        %v409 = vpop.f32.mrb[0].mxu0
        %410 = vmatprep.mubr.bf16.mxu0 0
        %411 = vmatmul.mubr.bf16.gmra.mrb[0].mxu0 %v272
        %v412 = vpop.f32.mrb[0].mxu0
        %v413 = vadd.f32 0.0, %v412
        %v414 = vpop.f32.mrb[0].mxu0
        %v415 = vpop.f32.mrb[0].mxu0
        %v416 = vadd.f32 0.0, %v415
        %v417 = vpop.f32.mrb[0].mxu0
        %418 = vmatprep.mubr.bf16.mxu0 0
        %419 = vmatmul.mubr.bf16.gmra.mrb[0].mxu0 %v273
        %v420 = vpop.f32.mrb[0].mxu0
        %v421 = vadd.f32 0.0, %v420
        %v422 = vpop.f32.mrb[0].mxu0
        %v423 = vpop.f32.mrb[0].mxu0
        %v424 = vadd.f32 0.0, %v423
        %v425 = vpop.f32.mrb[0].mxu0
        %426 = vdwg.mxu0
        %v427 = vpack.c.bf16 %v368, %v365
        %v428 = vpack.c.bf16 %v376, %v373
        %v429 = vpack.c.bf16 %v384, %v381
        %v430 = vpack.c.bf16 %v392, %v389
        %v431 = vpack.c.bf16 %v400, %v397
        %v432 = vpack.c.bf16 %v408, %v405
        %v433 = vpack.c.bf16 %v416, %v413
        %v434 = vpack.c.bf16 %v424, %v421
        %v443 = vunpack.c.l.b16 %v427
        %v444 = vunpack.c.h.b16 %v427
        %v445 = vunpack.c.l.b16 %v428
        %v446 = vunpack.c.h.b16 %v428
        %v447 = vunpack.c.l.b16 %v429
        %v448 = vunpack.c.h.b16 %v429
        %v449 = vunpack.c.l.b16 %v430
        %v450 = vunpack.c.h.b16 %v430
        %v451 = vunpack.c.l.b16 %v431
        %v452 = vunpack.c.h.b16 %v431
        %v453 = vunpack.c.l.b16 %v432
        %v454 = vunpack.c.h.b16 %v432
        %v455 = vunpack.c.l.b16 %v433
        %v456 = vunpack.c.h.b16 %v433
        %v457 = vunpack.c.l.b16 %v434
        %v458 = vunpack.c.h.b16 %v434
        %v459 = vpack.c.b16 %v443, %v443
        %v460 = vpack.c.b16 %v444, %v444
        %v461 = vpack.c.b16 %v445, %v445
        %v462 = vpack.c.b16 %v446, %v446
        %v463 = vpack.c.b16 %v447, %v447
        %v464 = vpack.c.b16 %v448, %v448
        %v465 = vpack.c.b16 %v449, %v449
        %v466 = vpack.c.b16 %v450, %v450
        %v467 = vpack.c.b16 %v451, %v451
        %v468 = vpack.c.b16 %v452, %v452
        %v469 = vpack.c.b16 %v453, %v453
        %v470 = vpack.c.b16 %v454, %v454
        %v471 = vpack.c.b16 %v455, %v455
        %v472 = vpack.c.b16 %v456, %v456
        %v473 = vpack.c.b16 %v457, %v457
        %v474 = vpack.c.b16 %v458, %v458
        %491 = vst [vmem:[%s198] sm:$0xf] %v459
        %492 = vst [vmem:[%s198 + $0x4] sm:$0xf] %v460
        %493 = vst [vmem:[%s198 + $0x8] sm:$0xf] %v461
        %494 = vst [vmem:[%s198 + $0xc] sm:$0xf] %v462
        %495 = vst [vmem:[%s198 + $0x10] sm:$0xf] %v463
        %496 = vst [vmem:[%s198 + $0x14] sm:$0xf] %v464
        %497 = vst [vmem:[%s198 + $0x18] sm:$0xf] %v465
        %498 = vst [vmem:[%s198 + $0x1c] sm:$0xf] %v466
        %499 = vst [vmem:[%s198 + $0x20] sm:$0xf] %v467
        %500 = vst [vmem:[%s198 + $0x24] sm:$0xf] %v468
        %501 = vst [vmem:[%s198 + $0x28] sm:$0xf] %v469
        %502 = vst [vmem:[%s198 + $0x2c] sm:$0xf] %v470
        %503 = vst [vmem:[%s198 + $0x30] sm:$0xf] %v471
        %504 = vst [vmem:[%s198 + $0x34] sm:$0xf] %v472
        %505 = vst [vmem:[%s198 + $0x38] sm:$0xf] %v473
        %506 = vst [vmem:[%s198 + $0x3c] sm:$0xf] %v474
        %s507 = sand.u32 %s94, 1
        %s508 = scalar_lea.sflag [#allocation4], %s507
        %s509 = sand.u32 %s94, 1
        %s510 = smul.addr %s509, 64
        %s511 = scalar_lea.vmem [#allocation7], %s510
        // Predicated region
        $region37: #{tpu_custom_call.1} parent=27 // pred_check
          %p512 = pneg %p104
        $region38: #{tpu_custom_call.1} parent=27 // pred_check_branch
          %514 = sbr.rel (%p512) target = $region40
        $region39: #{tpu_custom_call.1} parent=27 // pred_region
          %s515 = smul.u32 16, %s24
          %s517 = ssub.s32 1024, 1024
          %518 = vsyncadd %s508, %s517
          %s519 = smul.addr %s25, 16
          %s520 = sadd.s32 %s515, %s519
          %s521 = smul.addr %s520, 64
          %s522 = scalar_lea.hbm %s2, %s521
          %s523 = sshll.u32 %s511, 4
          %s524 = int_to_ptr.vmem [resolvable:$true] %s523
          %529 = dma.vmem_to_hbm [thread:$0]  %s524, 1024, %s522, %s508, 64, 64, 4
        $region40: #{tpu_custom_call.1} parent=27 // pred_fallthru
          _
      $region28: #{tpu_custom_call.1} parent=5 // pred_fallthru
        _
      %p530 = scmp.le.s32.totalorder 2, %s15
      // Predicated region
      $region41: #{tpu_custom_call.1} parent=5 // pred_check
        %p531 = pneg %p530
      $region42: #{tpu_custom_call.1} parent=5 // pred_check_branch
        %533 = sbr.rel (%p531) target = $region44
      $region43: #{tpu_custom_call.1} parent=5 // pred_region
        %s534 = ssub.s32 %s15, 2
        // Predicated region
        $region45: #{tpu_custom_call.1} parent=43 // pred_check
          %p535 = pneg %p110
        $region46: #{tpu_custom_call.1} parent=43 // pred_check_branch
          %537 = sbr.rel (%p535) target = $region48
        $region47: #{tpu_custom_call.1} parent=43 // pred_region
          %s538 = sand.u32 %s95, 1
          %s539 = scalar_lea.sflag [#allocation4], %s538
          %s540 = sand.u32 %s95, 1
          %s541 = smul.addr %s540, 64
          %s542 = scalar_lea.vmem [#allocation7], %s541
          %543 = dma.done %s539, 1024
        $region48: #{tpu_custom_call.1} parent=43 // pred_fallthru
          _
      $region44: #{tpu_custom_call.1} parent=5 // pred_fallthru
        _
    $region6: #{tpu_custom_call.1} parent=1 // loop_footer
      %s19 = sadd.s32 1, %s15
    $region7: #{tpu_custom_call.1} parent=1 // loop_footer_branch
      %14 = sbr.rel target = $region3
    $region8: #{tpu_custom_call.1} parent=1 // loop_exit
      _
    %544 = vsyncpa [#allocation3], 1
    %s545 = scalar_lea.sflag [#allocation3], 1
    %546 = vsyncpa %s545, 1
    %547 = vsyncpa [#allocation6], 1
    %s548 = scalar_lea.sflag [#allocation6], 1
    %549 = vsyncpa %s548, 1
    %550 = vsyncpa [#allocation4], 1
    %s551 = scalar_lea.sflag [#allocation4], 1
    %552 = vsyncpa %s551, 1

</llo_original>
